<compile_context>
chip_gen: v5e
topology: v5e:2x2
jax: 0.10.0
libtpu: 0.0.40
codegen_flags: <defaults>
</compile_context>

<pallas_src>
import jax
import jax.numpy as jnp
from jax.experimental import pallas as pl
from jax.experimental.pallas import tpu as pltpu

# ----------------------------- configuration ------------------------------
NUM_LAYER = 3          # args.num_layer (must be >= 2)
EMB_DIM = 32           # args.emb_dim
NUM_TASKS = 3
NODE_FEAT_DIM = 9      # "complete" continuous node features
EDGE_FEAT_DIM = 3      # "complete" continuous edge features
BN_EPS = 1e-5
OUT_PAD = 128          # lane-dense output width (sliced back to NUM_TASKS in wrapper)
G_PAD = 8              # graph rows padded to a full sublane group


# ------------------------------ Pallas kernel ------------------------------
def gnn_graphpred_kernel(x_ref, A_ref, Esum_ref, P_ref,
                         Wemb_ref, WeFold_ref,
                         W1_ref, W2_ref, b2_ref,
                         Wp_ref, bp_ref,
                         out_ref):
    f32 = jnp.float32
    L = W1_ref.shape[0]
    H = W1_ref.shape[2]          # 2 * emb_dim

    A = A_ref[...]               # (N, N)   A[i, j] = # edges j -> i

    # node embedding: Linear(node_feat_dim -> emb_dim), bias folded into the ones column of x.
    h = jnp.dot(x_ref[...], Wemb_ref[...], preferred_element_type=f32)

    # Loop-invariant (independent of h) edge/degree/bias terms, already pushed through W1:
    #   edge_hid_all[:, l*H:(l+1)*H] = Esum @ We[l] @ W1[l] + deg * (be[l] @ W1[l]) + b1[l]
    # One stacked matmul fills L*H = 192 output lanes and can overlap with the first A@h.
    edge_hid_all = jnp.dot(Esum_ref[...], WeFold_ref[...], preferred_element_type=f32)

    for l in range(L):           # static unroll
        # GIN aggregate + update MLP (bias1 / edge term already in edge_hid_all)
        ah = jnp.dot(A, h, preferred_element_type=f32)
        hid = jnp.dot(ah, W1_ref[l], preferred_element_type=f32) \
            + edge_hid_all[:, l * H:(l + 1) * H]
        hid = jnp.maximum(hid, 0.0)
        # W2/b2 carry the folded eval-mode BatchNorm (scale = gamma*rsqrt(rvar+eps)).
        h = jnp.dot(hid, W2_ref[l], preferred_element_type=f32) + b2_ref[l]
        # ReLU on all but the last layer; dropout is identity in eval mode.
        if l != L - 1:
            h = jnp.maximum(h, 0.0)

    # JK = 'last'  ->  node_representation = h
    # global_mean_pool as (G_pad, N) @ (N, E); final Linear lane-padded to 128.
    g = jnp.dot(P_ref[...], h, preferred_element_type=f32)
    out_ref[...] = jnp.dot(g, Wp_ref[...], preferred_element_type=f32) + bp_ref[...]


def gnn_graphpred(x_aug, A, Esum_aug, P_pad, fused, num_graphs, num_tasks):
    n_inputs = 4 + len(fused)
    out = pl.pallas_call(
        gnn_graphpred_kernel,
        out_shape=jax.ShapeDtypeStruct((P_pad.shape[0], OUT_PAD), jnp.float32),
        in_specs=[pl.BlockSpec(memory_space=pltpu.MemorySpace.VMEM)] * n_inputs,
        out_specs=pl.BlockSpec(memory_space=pltpu.MemorySpace.VMEM),
    )(x_aug, A, Esum_aug, P_pad, *fused)
    return out[:num_graphs, :num_tasks]


# ------------------- trace-time parameter fusion (wrapper) ------------------
def fuse_params(params):
    (Wemb, bemb, We, be, W1, b1, W2, b2, gamma, beta, rmean, rvar, Wp, bp) = params
    L, E, H = W1.shape[0], W1.shape[1], W1.shape[2]
    T = Wp.shape[1]

    # node-embed bias -> extra row of Wemb (x gets a matching ones column)
    Wemb_aug = jnp.concatenate([Wemb, bemb], axis=0)                      # (Fn+1, E)

    # edge / degree / bias1 terms folded through W1, stacked over layers along lanes
    blocks = []
    for l in range(L):
        blk = jnp.concatenate([We[l] @ W1[l],       # (Fe, H)
                               be[l] @ W1[l],       # (1, H)
                               b1[l]], axis=0)      # (1, H)
        blocks.append(blk)                          # (Fe+2, H)
    WeFoldAll = jnp.concatenate(blocks, axis=1)                           # (Fe+2, L*H)

    # eval-mode BatchNorm folded into W2 / b2
    scale = gamma * jax.lax.rsqrt(rvar + BN_EPS)                          # (L, 1, E)
    W2f = W2 * scale                                                      # column scale
    b2f = (b2 - rmean) * scale + beta                                     # (L, 1, E)

    # lane-dense final linear
    Wp_pad = jnp.zeros((E, OUT_PAD), jnp.float32).at[:, :T].set(Wp)
    bp_pad = jnp.zeros((1, OUT_PAD), jnp.float32).at[:, :T].set(bp)

    return (Wemb_aug, WeFoldAll, W1, W2f, b2f, Wp_pad, bp_pad)


# ------------------------------ JAX reference ------------------------------
def reference_forward(x, A, Esum, deg, P, params):
    (Wemb, bemb, We, be, W1, b1, W2, b2, gamma, beta, rmean, rvar, Wp, bp) = params
    h = x @ Wemb + bemb
    L = We.shape[0]
    for l in range(L):
        edge_term = Esum @ We[l] + deg * be[l]
        aggr = A @ h + edge_term
        hid = jnp.maximum(aggr @ W1[l] + b1[l], 0.0)
        h = hid @ W2[l] + b2[l]
        h = (h - rmean[l]) / jnp.sqrt(rvar[l] + BN_EPS) * gamma[l] + beta[l]
        if l != L - 1:
            h = jnp.maximum(h, 0.0)
    g = P @ h
    return g @ Wp + bp


# --------------------------------- main ------------------------------------
if __name__ == "__main__":
    key = jax.random.PRNGKey(0)
    ks = jax.random.split(key, 20)

    # --- synthetic graph batch (small) ---
    N_NODES = 30          # real nodes
    N_PAD = 32            # padded to multiple of 8 sublanes
    N_EDGES = 60
    N_GRAPHS = 4

    x_nodes = jax.random.normal(ks[0], (N_NODES, NODE_FEAT_DIM), jnp.float32)
    edge_src = jax.random.randint(ks[1], (N_EDGES,), 0, N_NODES)
    edge_dst = jax.random.randint(ks[2], (N_EDGES,), 0, N_NODES)
    edge_attr = jax.random.normal(ks[3], (N_EDGES, EDGE_FEAT_DIM), jnp.float32)
    batch = jnp.sort(jax.random.randint(ks[4], (N_NODES,), 0, N_GRAPHS))

    # --- densify graph structure (glue, plain JAX) ---
    # TODO(synk): sparse scatter (edge_index/edge_attr -> A/Esum/deg, batch -> P) has no clean
    # small-scale Pallas equivalent; done here in JAX. At scale, replace the dense A with
    # scalar-prefetch-driven segment aggregation inside the kernel.
    x_pad = jnp.zeros((N_PAD, NODE_FEAT_DIM), jnp.float32).at[:N_NODES].set(x_nodes)
    A = jnp.zeros((N_PAD, N_PAD), jnp.float32).at[edge_dst, edge_src].add(1.0)
    Esum = jnp.zeros((N_PAD, EDGE_FEAT_DIM), jnp.float32).at[edge_dst].add(edge_attr)
    deg = jnp.zeros((N_PAD, 1), jnp.float32).at[edge_dst, 0].add(1.0)

    batch_pad = jnp.full((N_PAD,), -1, jnp.int32).at[:N_NODES].set(batch)
    onehot = (batch_pad[:, None] == jnp.arange(N_GRAPHS)[None, :]).astype(jnp.float32)  # (N, G)
    counts = jnp.maximum(onehot.sum(axis=0, keepdims=True), 1.0)
    P = (onehot / counts).T                                               # (G, N) mean pool
    P_pad = jnp.zeros((G_PAD, N_PAD), jnp.float32).at[:N_GRAPHS].set(P)   # sublane-padded

    # kernel-side augmented operands (bias / degree folds)
    ones_col = jnp.ones((N_PAD, 1), jnp.float32)
    x_aug = jnp.concatenate([x_pad, ones_col], axis=1)                    # (N, Fn+1)
    Esum_aug = jnp.concatenate([Esum, deg, ones_col], axis=1)             # (N, Fe+2)

    # --- deterministic parameter init (synthetic, not a checkpoint) ---
    E, L, T = EMB_DIM, NUM_LAYER, NUM_TASKS

    def init(k, shape, scale=0.1):
        return scale * jax.random.normal(k, shape, jnp.float32)

    Wemb = init(ks[5], (NODE_FEAT_DIM, E))
    bemb = init(ks[6], (1, E))
    We = init(ks[7], (L, EDGE_FEAT_DIM, E))
    be = init(ks[8], (L, 1, E))
    W1 = init(ks[9], (L, E, 2 * E))
    b1 = init(ks[10], (L, 1, 2 * E))
    W2 = init(ks[11], (L, 2 * E, E))
    b2 = init(ks[12], (L, 1, E))
    gamma = 1.0 + init(ks[13], (L, 1, E), 0.01)
    beta = init(ks[14], (L, 1, E), 0.01)
    rmean = init(ks[15], (L, 1, E), 0.01)
    rvar = 1.0 + jnp.abs(init(ks[16], (L, 1, E), 0.01))
    Wp = init(ks[17], (E, T))
    bp = init(ks[18], (1, T))

    params = (Wemb, bemb, We, be, W1, b1, W2, b2, gamma, beta, rmean, rvar, Wp, bp)
    fused = fuse_params(params)

    # --- run Pallas kernel ---
    out = gnn_graphpred(x_aug, A, Esum_aug, P_pad, fused, N_GRAPHS, T)
    out = jax.block_until_ready(out)

    # --- correctness check vs pure-JAX reference (original, un-fused math) ---
    ref = reference_forward(x_pad, A, Esum, deg, P, params)
    assert out.shape == (N_GRAPHS, T)
    assert jnp.allclose(out, ref, atol=1e-4, rtol=1e-4), (out, ref)

    print("KERNEL_OK")
</pallas_src>

<mosaic_0001>
module attributes {stable_mosaic.version = 11 : i64} {
  func.func @gnn_graphpred_kernel(%arg0: memref<32x10xf32, #tpu.memory_space<vmem>>, %arg1: memref<32x32xf32, #tpu.memory_space<vmem>>, %arg2: memref<32x5xf32, #tpu.memory_space<vmem>>, %arg3: memref<8x32xf32, #tpu.memory_space<vmem>>, %arg4: memref<10x32xf32, #tpu.memory_space<vmem>>, %arg5: memref<5x192xf32, #tpu.memory_space<vmem>>, %arg6: memref<3x32x64xf32, #tpu.memory_space<vmem>>, %arg7: memref<3x64x32xf32, #tpu.memory_space<vmem>>, %arg8: memref<3x1x32xf32, #tpu.memory_space<vmem>>, %arg9: memref<32x128xf32, #tpu.memory_space<vmem>>, %arg10: memref<1x128xf32, #tpu.memory_space<vmem>>, %arg11: memref<8x128xf32, #tpu.memory_space<vmem>>) attributes {dimension_semantics = [], scalar_prefetch = 0 : i64, scratch_operands = 0 : i64, tpu.core_type = #tpu.core_type<tc>} {
    %c0 = arith.constant 0 : index
    %c0_0 = arith.constant 0 : index
    %0 = vector.load %arg1[%c0, %c0_0] : memref<32x32xf32, #tpu.memory_space<vmem>>, vector<32x32xf32>
    %c0_1 = arith.constant 0 : index
    %c0_2 = arith.constant 0 : index
    %1 = vector.load %arg0[%c0_1, %c0_2] : memref<32x10xf32, #tpu.memory_space<vmem>>, vector<32x10xf32>
    %c0_3 = arith.constant 0 : index
    %c0_4 = arith.constant 0 : index
    %2 = vector.load %arg4[%c0_3, %c0_4] : memref<10x32xf32, #tpu.memory_space<vmem>>, vector<10x32xf32>
    %cst = arith.constant dense<0.000000e+00> : vector<32x32xf32>
    %3 = tpu.matmul %1, %2, %cst {dimension_numbers = #tpu.dot_dimension_numbers<[1], [0], [0], [1], [0, 0, 1, 1], [], []>} : vector<32x10xf32>, vector<10x32xf32>, vector<32x32xf32> -> vector<32x32xf32>
    %c0_5 = arith.constant 0 : index
    %c0_6 = arith.constant 0 : index
    %4 = vector.load %arg2[%c0_5, %c0_6] : memref<32x5xf32, #tpu.memory_space<vmem>>, vector<32x5xf32>
    %c0_7 = arith.constant 0 : index
    %c0_8 = arith.constant 0 : index
    %5 = vector.load %arg5[%c0_7, %c0_8] : memref<5x192xf32, #tpu.memory_space<vmem>>, vector<5x192xf32>
    %cst_9 = arith.constant dense<0.000000e+00> : vector<32x192xf32>
    %6 = tpu.matmul %4, %5, %cst_9 {dimension_numbers = #tpu.dot_dimension_numbers<[1], [0], [0], [1], [0, 0, 1, 1], [], []>} : vector<32x5xf32>, vector<5x192xf32>, vector<32x192xf32> -> vector<32x192xf32>
    %cst_10 = arith.constant dense<0.000000e+00> : vector<32x32xf32>
    %7 = tpu.matmul %0, %3, %cst_10 {dimension_numbers = #tpu.dot_dimension_numbers<[1], [0], [0], [1], [0, 0, 1, 1], [], []>} : vector<32x32xf32>, vector<32x32xf32>, vector<32x32xf32> -> vector<32x32xf32>
    %c0_11 = arith.constant 0 : index
    %c0_12 = arith.constant 0 : index
    %c0_13 = arith.constant 0 : index
    %8 = vector.load %arg6[%c0_11, %c0_12, %c0_13] : memref<3x32x64xf32, #tpu.memory_space<vmem>>, vector<1x32x64xf32>
    %9 = vector.shape_cast %8 : vector<1x32x64xf32> to vector<32x64xf32>
    %cst_14 = arith.constant dense<0.000000e+00> : vector<32x64xf32>
    %10 = tpu.matmul %7, %9, %cst_14 {dimension_numbers = #tpu.dot_dimension_numbers<[1], [0], [0], [1], [0, 0, 1, 1], [], []>} : vector<32x32xf32>, vector<32x64xf32>, vector<32x64xf32> -> vector<32x64xf32>
    %11 = vector.extract_strided_slice %6 {offsets = [0, 0], sizes = [32, 64], strides = [1, 1]} : vector<32x192xf32> to vector<32x64xf32>
    %12 = arith.addf %10, %11 : vector<32x64xf32>
    %cst_15 = arith.constant 0.000000e+00 : f32
    %13 = vector.broadcast %cst_15 : f32 to vector<32x64xf32>
    %14 = arith.maximumf %12, %13 : vector<32x64xf32>
    %c0_16 = arith.constant 0 : index
    %c0_17 = arith.constant 0 : index
    %c0_18 = arith.constant 0 : index
    %15 = vector.load %arg7[%c0_16, %c0_17, %c0_18] : memref<3x64x32xf32, #tpu.memory_space<vmem>>, vector<1x64x32xf32>
    %16 = vector.shape_cast %15 : vector<1x64x32xf32> to vector<64x32xf32>
    %cst_19 = arith.constant dense<0.000000e+00> : vector<32x32xf32>
    %17 = tpu.matmul %14, %16, %cst_19 {dimension_numbers = #tpu.dot_dimension_numbers<[1], [0], [0], [1], [0, 0, 1, 1], [], []>} : vector<32x64xf32>, vector<64x32xf32>, vector<32x32xf32> -> vector<32x32xf32>
    %c0_20 = arith.constant 0 : index
    %c0_21 = arith.constant 0 : index
    %c0_22 = arith.constant 0 : index
    %18 = vector.load %arg8[%c0_20, %c0_21, %c0_22] : memref<3x1x32xf32, #tpu.memory_space<vmem>>, vector<1x1x32xf32>
    %19 = vector.shape_cast %18 : vector<1x1x32xf32> to vector<1x32xf32>
    %20 = vector.broadcast %19 : vector<1x32xf32> to vector<32x32xf32>
    %21 = arith.addf %17, %20 : vector<32x32xf32>
    %cst_23 = arith.constant 0.000000e+00 : f32
    %22 = vector.broadcast %cst_23 : f32 to vector<32x32xf32>
    %23 = arith.maximumf %21, %22 : vector<32x32xf32>
    %cst_24 = arith.constant dense<0.000000e+00> : vector<32x32xf32>
    %24 = tpu.matmul %0, %23, %cst_24 {dimension_numbers = #tpu.dot_dimension_numbers<[1], [0], [0], [1], [0, 0, 1, 1], [], []>} : vector<32x32xf32>, vector<32x32xf32>, vector<32x32xf32> -> vector<32x32xf32>
    %c1 = arith.constant 1 : index
    %c0_25 = arith.constant 0 : index
    %c0_26 = arith.constant 0 : index
    %25 = vector.load %arg6[%c1, %c0_25, %c0_26] : memref<3x32x64xf32, #tpu.memory_space<vmem>>, vector<1x32x64xf32>
    %26 = vector.shape_cast %25 : vector<1x32x64xf32> to vector<32x64xf32>
    %cst_27 = arith.constant dense<0.000000e+00> : vector<32x64xf32>
    %27 = tpu.matmul %24, %26, %cst_27 {dimension_numbers = #tpu.dot_dimension_numbers<[1], [0], [0], [1], [0, 0, 1, 1], [], []>} : vector<32x32xf32>, vector<32x64xf32>, vector<32x64xf32> -> vector<32x64xf32>
    %28 = vector.extract_strided_slice %6 {offsets = [0, 64], sizes = [32, 64], strides = [1, 1]} : vector<32x192xf32> to vector<32x64xf32>
    %29 = arith.addf %27, %28 : vector<32x64xf32>
    %cst_28 = arith.constant 0.000000e+00 : f32
    %30 = vector.broadcast %cst_28 : f32 to vector<32x64xf32>
    %31 = arith.maximumf %29, %30 : vector<32x64xf32>
    %c1_29 = arith.constant 1 : index
    %c0_30 = arith.constant 0 : index
    %c0_31 = arith.constant 0 : index
    %32 = vector.load %arg7[%c1_29, %c0_30, %c0_31] : memref<3x64x32xf32, #tpu.memory_space<vmem>>, vector<1x64x32xf32>
    %33 = vector.shape_cast %32 : vector<1x64x32xf32> to vector<64x32xf32>
    %cst_32 = arith.constant dense<0.000000e+00> : vector<32x32xf32>
    %34 = tpu.matmul %31, %33, %cst_32 {dimension_numbers = #tpu.dot_dimension_numbers<[1], [0], [0], [1], [0, 0, 1, 1], [], []>} : vector<32x64xf32>, vector<64x32xf32>, vector<32x32xf32> -> vector<32x32xf32>
    %c1_33 = arith.constant 1 : index
    %c0_34 = arith.constant 0 : index
    %c0_35 = arith.constant 0 : index
    %35 = vector.load %arg8[%c1_33, %c0_34, %c0_35] : memref<3x1x32xf32, #tpu.memory_space<vmem>>, vector<1x1x32xf32>
    %36 = vector.shape_cast %35 : vector<1x1x32xf32> to vector<1x32xf32>
    %37 = vector.broadcast %36 : vector<1x32xf32> to vector<32x32xf32>
    %38 = arith.addf %34, %37 : vector<32x32xf32>
    %cst_36 = arith.constant 0.000000e+00 : f32
    %39 = vector.broadcast %cst_36 : f32 to vector<32x32xf32>
    %40 = arith.maximumf %38, %39 : vector<32x32xf32>
    %cst_37 = arith.constant dense<0.000000e+00> : vector<32x32xf32>
    %41 = tpu.matmul %0, %40, %cst_37 {dimension_numbers = #tpu.dot_dimension_numbers<[1], [0], [0], [1], [0, 0, 1, 1], [], []>} : vector<32x32xf32>, vector<32x32xf32>, vector<32x32xf32> -> vector<32x32xf32>
    %c2 = arith.constant 2 : index
    %c0_38 = arith.constant 0 : index
    %c0_39 = arith.constant 0 : index
    %42 = vector.load %arg6[%c2, %c0_38, %c0_39] : memref<3x32x64xf32, #tpu.memory_space<vmem>>, vector<1x32x64xf32>
    %43 = vector.shape_cast %42 : vector<1x32x64xf32> to vector<32x64xf32>
    %cst_40 = arith.constant dense<0.000000e+00> : vector<32x64xf32>
    %44 = tpu.matmul %41, %43, %cst_40 {dimension_numbers = #tpu.dot_dimension_numbers<[1], [0], [0], [1], [0, 0, 1, 1], [], []>} : vector<32x32xf32>, vector<32x64xf32>, vector<32x64xf32> -> vector<32x64xf32>
    %45 = vector.extract_strided_slice %6 {offsets = [0, 128], sizes = [32, 64], strides = [1, 1]} : vector<32x192xf32> to vector<32x64xf32>
    %46 = arith.addf %44, %45 : vector<32x64xf32>
    %cst_41 = arith.constant 0.000000e+00 : f32
    %47 = vector.broadcast %cst_41 : f32 to vector<32x64xf32>
    %48 = arith.maximumf %46, %47 : vector<32x64xf32>
    %c2_42 = arith.constant 2 : index
    %c0_43 = arith.constant 0 : index
    %c0_44 = arith.constant 0 : index
    %49 = vector.load %arg7[%c2_42, %c0_43, %c0_44] : memref<3x64x32xf32, #tpu.memory_space<vmem>>, vector<1x64x32xf32>
    %50 = vector.shape_cast %49 : vector<1x64x32xf32> to vector<64x32xf32>
    %cst_45 = arith.constant dense<0.000000e+00> : vector<32x32xf32>
    %51 = tpu.matmul %48, %50, %cst_45 {dimension_numbers = #tpu.dot_dimension_numbers<[1], [0], [0], [1], [0, 0, 1, 1], [], []>} : vector<32x64xf32>, vector<64x32xf32>, vector<32x32xf32> -> vector<32x32xf32>
    %c2_46 = arith.constant 2 : index
    %c0_47 = arith.constant 0 : index
    %c0_48 = arith.constant 0 : index
    %52 = vector.load %arg8[%c2_46, %c0_47, %c0_48] : memref<3x1x32xf32, #tpu.memory_space<vmem>>, vector<1x1x32xf32>
    %53 = vector.shape_cast %52 : vector<1x1x32xf32> to vector<1x32xf32>
    %54 = vector.broadcast %53 : vector<1x32xf32> to vector<32x32xf32>
    %55 = arith.addf %51, %54 : vector<32x32xf32>
    %c0_49 = arith.constant 0 : index
    %c0_50 = arith.constant 0 : index
    %56 = vector.load %arg3[%c0_49, %c0_50] : memref<8x32xf32, #tpu.memory_space<vmem>>, vector<8x32xf32>
    %cst_51 = arith.constant dense<0.000000e+00> : vector<8x32xf32>
    %57 = tpu.matmul %56, %55, %cst_51 {dimension_numbers = #tpu.dot_dimension_numbers<[1], [0], [0], [1], [0, 0, 1, 1], [], []>} : vector<8x32xf32>, vector<32x32xf32>, vector<8x32xf32> -> vector<8x32xf32>
    %c0_52 = arith.constant 0 : index
    %c0_53 = arith.constant 0 : index
    %58 = vector.load %arg9[%c0_52, %c0_53] : memref<32x128xf32, #tpu.memory_space<vmem>>, vector<32x128xf32>
    %cst_54 = arith.constant dense<0.000000e+00> : vector<8x128xf32>
    %59 = tpu.matmul %57, %58, %cst_54 {dimension_numbers = #tpu.dot_dimension_numbers<[1], [0], [0], [1], [0, 0, 1, 1], [], []>} : vector<8x32xf32>, vector<32x128xf32>, vector<8x128xf32> -> vector<8x128xf32>
    %c0_55 = arith.constant 0 : index
    %c0_56 = arith.constant 0 : index
    %60 = vector.load %arg10[%c0_55, %c0_56] : memref<1x128xf32, #tpu.memory_space<vmem>>, vector<1x128xf32>
    %61 = vector.broadcast %60 : vector<1x128xf32> to vector<8x128xf32>
    %62 = arith.addf %59, %61 : vector<8x128xf32>
    %c0_57 = arith.constant 0 : index
    %c0_58 = arith.constant 0 : index
    %63 = vector.load %arg11[%c0_57, %c0_58] : memref<8x128xf32, #tpu.memory_space<vmem>>, vector<8x128xf32>
    tpu.vector_store %arg11[%c0_57, %c0_58], %62 {strides = array<i32>} : memref<8x128xf32, #tpu.memory_space<vmem>>, vector<8x128xf32>,
    return
  }
}

</mosaic_0001>

<llo_original>
// kernel: tpu_custom_call.1
$region0: #{tpu_custom_call.1}
  #allocation0 [shape = 'u32[]', space=smem, size = 0x4, offset = 0x4, fixed_abs, tag = 'smem constant byte address 0x4 - core index']
  #allocation1 [shape = 'u32[72,128]{1,0:T(1,128)}', space=vmem, size = 0x9000, scoped, tag = 'internal scratch']
  %s0 = inlined_call_operand.vmem [shape: f32[32,10], index: 0, kind: input, shape index: {}]
  %s1 = inlined_call_operand.vmem [shape: f32[32,32], index: 1, kind: input, shape index: {}]
  %s2 = inlined_call_operand.vmem [shape: f32[32,5], index: 2, kind: input, shape index: {}]
  %s3 = inlined_call_operand.vmem [shape: f32[8,32], index: 3, kind: input, shape index: {}]
  %s4 = inlined_call_operand.vmem [shape: f32[10,32], index: 4, kind: input, shape index: {}]
  %s5 = inlined_call_operand.vmem [shape: f32[5,192], index: 5, kind: input, shape index: {}]
  %s6 = inlined_call_operand.vmem [shape: f32[3,32,64], index: 6, kind: input, shape index: {}]
  %s7 = inlined_call_operand.vmem [shape: f32[3,64,32], index: 7, kind: input, shape index: {}]
  %s8 = inlined_call_operand.vmem [shape: f32[3,1,32], index: 8, kind: input, shape index: {}]
  %s9 = inlined_call_operand.vmem [shape: f32[32,128], index: 9, kind: input, shape index: {}]
  %s10 = inlined_call_operand.vmem [shape: f32[1,128], index: 10, kind: input, shape index: {}]
  %s11 = inlined_call_operand.hbm [shape: f32[8,128], index: 11, kind: output, shape index: {}]
  %s12 = sld [smem:[#allocation0]]
  $region54: #{tpu_custom_call.1} parent=0
    _
  %s14 = ssub.s32 1, %s12
  %s15 = scalar_select 0, %s14, %s12
  $region1: #{tpu_custom_call.1} parent=0
    #allocation2 [shape = 'u8[4096]{0}', space=vmem, size = 0x1000, scoped, tag = 'output window, operand 0, single buffered']
    #allocation3 [shape = 's32[1]{0}', space=sflag, size = 0x4, scoped, tag = 'scoped memory for tpu_custom_call.1']
    %16 = vsyncpa [#allocation3], 0
    // Predicated region
    $region2: #{tpu_custom_call.1} parent=1 // pred_check
      _
    $region3: #{tpu_custom_call.1} parent=1 // pred_check_branch
      %18 = sbr.rel (0) target = $region5
    $region4: #{tpu_custom_call.1} parent=1 // pred_region
      _
    $region5: #{tpu_custom_call.1} parent=1 // pred_fallthru
      _
    // Predicated region
    $region6: #{tpu_custom_call.1} parent=1 // pred_check
      _
    $region7: #{tpu_custom_call.1} parent=1 // pred_check_branch
      %20 = sbr.rel (0) target = $region9
    $region8: #{tpu_custom_call.1} parent=1 // pred_region
      _
    $region9: #{tpu_custom_call.1} parent=1 // pred_fallthru
      _
    // Predicated region
    $region10: #{tpu_custom_call.1} parent=1 // pred_check
      _
    $region11: #{tpu_custom_call.1} parent=1 // pred_check_branch
      %22 = sbr.rel (0) target = $region13
    $region12: #{tpu_custom_call.1} parent=1 // pred_region
      _
    $region13: #{tpu_custom_call.1} parent=1 // pred_fallthru
      _
    // Predicated region
    $region14: #{tpu_custom_call.1} parent=1 // pred_check
      _
    $region15: #{tpu_custom_call.1} parent=1 // pred_check_branch
      %24 = sbr.rel (0) target = $region17
    $region16: #{tpu_custom_call.1} parent=1 // pred_region
      _
    $region17: #{tpu_custom_call.1} parent=1 // pred_fallthru
      _
    // Predicated region
    $region18: #{tpu_custom_call.1} parent=1 // pred_check
      _
    $region19: #{tpu_custom_call.1} parent=1 // pred_check_branch
      %26 = sbr.rel (0) target = $region21
    $region20: #{tpu_custom_call.1} parent=1 // pred_region
      _
    $region21: #{tpu_custom_call.1} parent=1 // pred_fallthru
      _
    // Predicated region
    $region22: #{tpu_custom_call.1} parent=1 // pred_check
      _
    $region23: #{tpu_custom_call.1} parent=1 // pred_check_branch
      %28 = sbr.rel (0) target = $region25
    $region24: #{tpu_custom_call.1} parent=1 // pred_region
      _
    $region25: #{tpu_custom_call.1} parent=1 // pred_fallthru
      _
    // Predicated region
    $region26: #{tpu_custom_call.1} parent=1 // pred_check
      _
    $region27: #{tpu_custom_call.1} parent=1 // pred_check_branch
      %30 = sbr.rel (0) target = $region29
    $region28: #{tpu_custom_call.1} parent=1 // pred_region
      _
    $region29: #{tpu_custom_call.1} parent=1 // pred_fallthru
      _
    // Predicated region
    $region30: #{tpu_custom_call.1} parent=1 // pred_check
      _
    $region31: #{tpu_custom_call.1} parent=1 // pred_check_branch
      %32 = sbr.rel (0) target = $region33
    $region32: #{tpu_custom_call.1} parent=1 // pred_region
      _
    $region33: #{tpu_custom_call.1} parent=1 // pred_fallthru
      _
    // Predicated region
    $region34: #{tpu_custom_call.1} parent=1 // pred_check
      _
    $region35: #{tpu_custom_call.1} parent=1 // pred_check_branch
      %34 = sbr.rel (0) target = $region37
    $region36: #{tpu_custom_call.1} parent=1 // pred_region
      _
    $region37: #{tpu_custom_call.1} parent=1 // pred_fallthru
      _
    // Predicated region
    $region38: #{tpu_custom_call.1} parent=1 // pred_check
      _
    $region39: #{tpu_custom_call.1} parent=1 // pred_check_branch
      %36 = sbr.rel (0) target = $region41
    $region40: #{tpu_custom_call.1} parent=1 // pred_region
      _
    $region41: #{tpu_custom_call.1} parent=1 // pred_fallthru
      _
    // Predicated region
    $region42: #{tpu_custom_call.1} parent=1 // pred_check
      _
    $region43: #{tpu_custom_call.1} parent=1 // pred_check_branch
      %38 = sbr.rel (0) target = $region45
    $region44: #{tpu_custom_call.1} parent=1 // pred_region
      _
    $region45: #{tpu_custom_call.1} parent=1 // pred_fallthru
      _
    %v39 = vld [vmem:[%s1] sm:$0xff]
    %v40 = vld [vmem:[%s1 + $0x8] sm:$0xff]
    %v41 = vld [vmem:[%s1 + $0x10] sm:$0xff]
    %v42 = vld [vmem:[%s1 + $0x18] sm:$0xff]
    %v43 = vld [vmem:[%s0] sm:$0xff]
    %v44 = vld [vmem:[%s0 + $0x8] sm:$0xff]
    %v45 = vld [vmem:[%s0 + $0x10] sm:$0xff]
    %v46 = vld [vmem:[%s0 + $0x18] sm:$0xff]
    %v47 = vld [vmem:[%s4] sm:$0xff]
    %v48 = vld [vmem:[%s4 + $0x8] sm:$0x3]
    %vm49 = vcmask 80896
    %v51 = vsel %vm49, %v43, 0
    %v54 = vsel %vm49, %v44, 0
    %v57 = vsel %vm49, %v45, 0
    %v60 = vsel %vm49, %v46, 0
    %vm62 = vcmask 1041408
    %v64 = vsel %vm62, %v48, 0
    %66 = vmatpush.msra.mxu0 0.0
    %67 = vmatpush.msra.mxu0 0.0
    %68 = vmatpush.msra.mxu0 0.0
    %69 = vmatpush.msra.mxu0 0.0
    %70 = vmatpush.msra.mxu0 0.0
    %71 = vmatpush.msra.mxu0 0.0
    %72 = vmatpush.msra.mxu0 0.0
    %73 = vmatpush.msra.mxu0 0.0
    %74 = vmatpush.msra.mxu0 0.0
    %75 = vmatpush.msra.mxu0 0.0
    %76 = vmatpush.msra.mxu0 0.0
    %77 = vmatpush.msra.mxu0 0.0
    %78 = vmatpush.msra.mxu0 0.0
    %79 = vmatpush.msra.mxu0 0.0
    %80 = vmatpush.msra.mxu0 %v64
    %81 = vmatpush.msra.mxu0 %v47
    %82 = vmatmul.f32.gmra.mxu0 %v51
    %v83 = vpop.f32.mrf.mxu0
    %v84 = vadd.f32 0.0, %v83
    %85 = vmatmul.f32.gmra.mxu0 %v54
    %v86 = vpop.f32.mrf.mxu0
    %v87 = vadd.f32 0.0, %v86
    %88 = vmatmul.f32.gmra.mxu0 %v57
    %v89 = vpop.f32.mrf.mxu0
    %v90 = vadd.f32 0.0, %v89
    %91 = vmatmul.f32.gmra.mxu0 %v60
    %v92 = vpop.f32.mrf.mxu0
    %v93 = vadd.f32 0.0, %v92
    %94 = vdwg.mxu0
    %v95 = vld [vmem:[%s2] sm:$0xff]
    %v96 = vld [vmem:[%s2 + $0x8] sm:$0xff]
    %v97 = vld [vmem:[%s2 + $0x10] sm:$0xff]
    %v98 = vld [vmem:[%s2 + $0x18] sm:$0xff]
    %v99 = vld [vmem:[%s5] sm:$0x1f]
    %v100 = vld [vmem:[%s5 + $0x8] sm:$0x1f]
    %vm101 = vcmask 39936
    %v103 = vsel %vm101, %v95, 0
    %v106 = vsel %vm101, %v96, 0
    %v109 = vsel %vm101, %v97, 0
    %v112 = vsel %vm101, %v98, 0
    %vm114 = vcmask 1044480
    %v116 = vsel %vm114, %v99, 0
    %v119 = vsel %vm114, %v100, 0
    %121 = vmatpush.msra.mxu0 0.0
    %122 = vmatpush.msra.mxu0 0.0
    %123 = vmatpush.msra.mxu0 0.0
    %124 = vmatpush.msra.mxu0 0.0
    %125 = vmatpush.msra.mxu0 0.0
    %126 = vmatpush.msra.mxu0 0.0
    %127 = vmatpush.msra.mxu0 0.0
    %128 = vmatpush.msra.mxu0 0.0
    %129 = vmatpush.msra.mxu0 0.0
    %130 = vmatpush.msra.mxu0 0.0
    %131 = vmatpush.msra.mxu0 0.0
    %132 = vmatpush.msra.mxu0 0.0
    %133 = vmatpush.msra.mxu0 0.0
    %134 = vmatpush.msra.mxu0 0.0
    %135 = vmatpush.msra.mxu0 0.0
    %136 = vmatpush.msra.mxu0 %v116
    %137 = vmatmul.f32.gmra.mxu0 %v103
    %v138 = vpop.f32.mrf.mxu0
    %v139 = vadd.f32 0.0, %v138
    %140 = vmatmul.f32.gmra.mxu0 %v106
    %v141 = vpop.f32.mrf.mxu0
    %v142 = vadd.f32 0.0, %v141
    %143 = vmatmul.f32.gmra.mxu0 %v109
    %v144 = vpop.f32.mrf.mxu0
    %v145 = vadd.f32 0.0, %v144
    %146 = vmatmul.f32.gmra.mxu0 %v112
    %v147 = vpop.f32.mrf.mxu0
    %v148 = vadd.f32 0.0, %v147
    %149 = vdwg.mxu0
    %150 = vmatpush.msra.mxu0 0.0
    %151 = vmatpush.msra.mxu0 0.0
    %152 = vmatpush.msra.mxu0 0.0
    %153 = vmatpush.msra.mxu0 0.0
    %154 = vmatpush.msra.mxu0 0.0
    %155 = vmatpush.msra.mxu0 0.0
    %156 = vmatpush.msra.mxu0 0.0
    %157 = vmatpush.msra.mxu0 0.0
    %158 = vmatpush.msra.mxu0 0.0
    %159 = vmatpush.msra.mxu0 0.0
    %160 = vmatpush.msra.mxu0 0.0
    %161 = vmatpush.msra.mxu0 0.0
    %162 = vmatpush.msra.mxu0 0.0
    %163 = vmatpush.msra.mxu0 0.0
    %164 = vmatpush.msra.mxu0 0.0
    %165 = vmatpush.msra.mxu0 %v119
    %166 = vmatmul.f32.gmra.mxu0 %v103
    %v167 = vpop.f32.mrf.mxu0
    %v168 = vadd.f32 0.0, %v167
    %169 = vmatmul.f32.gmra.mxu0 %v106
    %v170 = vpop.f32.mrf.mxu0
    %v171 = vadd.f32 0.0, %v170
    %172 = vmatmul.f32.gmra.mxu0 %v109
    %v173 = vpop.f32.mrf.mxu0
    %v174 = vadd.f32 0.0, %v173
    %175 = vmatmul.f32.gmra.mxu0 %v112
    %v176 = vpop.f32.mrf.mxu0
    %v177 = vadd.f32 0.0, %v176
    %178 = vdwg.mxu0
    %vm179 = vcmask 261120
    %v181 = vsel %vm179, %v39, 0
    %v184 = vsel %vm179, %v40, 0
    %v187 = vsel %vm179, %v41, 0
    %v190 = vsel %vm179, %v42, 0
    %192 = vmatpush.msra.mxu0 0.0
    %193 = vmatpush.msra.mxu0 0.0
    %194 = vmatpush.msra.mxu0 0.0
    %195 = vmatpush.msra.mxu0 0.0
    %196 = vmatpush.msra.mxu0 0.0
    %197 = vmatpush.msra.mxu0 0.0
    %198 = vmatpush.msra.mxu0 0.0
    %199 = vmatpush.msra.mxu0 0.0
    %200 = vmatpush.msra.mxu0 0.0
    %201 = vmatpush.msra.mxu0 0.0
    %202 = vmatpush.msra.mxu0 0.0
    %203 = vmatpush.msra.mxu0 0.0
    %204 = vmatpush.msra.mxu0 %v93
    %205 = vmatpush.msra.mxu0 %v90
    %206 = vmatpush.msra.mxu0 %v87
    %207 = vmatpush.msra.mxu0 %v84
    %208 = vmatmul.f32.gmra.mxu0 %v181
    %v209 = vpop.f32.mrf.mxu0
    %v210 = vadd.f32 0.0, %v209
    %211 = vmatmul.f32.gmra.mxu0 %v184
    %v212 = vpop.f32.mrf.mxu0
    %v213 = vadd.f32 0.0, %v212
    %214 = vmatmul.f32.gmra.mxu0 %v187
    %v215 = vpop.f32.mrf.mxu0
    %v216 = vadd.f32 0.0, %v215
    %217 = vmatmul.f32.gmra.mxu0 %v190
    %v218 = vpop.f32.mrf.mxu0
    %v219 = vadd.f32 0.0, %v218
    %220 = vdwg.mxu0
    %v221 = vld [vmem:[%s6] sm:$0xff]
    %v222 = vld [vmem:[%s6 + $0x8] sm:$0xff]
    %v223 = vld [vmem:[%s6 + $0x10] sm:$0xff]
    %v224 = vld [vmem:[%s6 + $0x18] sm:$0xff]
    %v226 = vsel %vm179, %v210, 0
    %v229 = vsel %vm179, %v213, 0
    %v232 = vsel %vm179, %v216, 0
    %v235 = vsel %vm179, %v219, 0
    %237 = vmatpush.msra.mxu0 0.0
    %238 = vmatpush.msra.mxu0 0.0
    %239 = vmatpush.msra.mxu0 0.0
    %240 = vmatpush.msra.mxu0 0.0
    %241 = vmatpush.msra.mxu0 0.0
    %242 = vmatpush.msra.mxu0 0.0
    %243 = vmatpush.msra.mxu0 0.0
    %244 = vmatpush.msra.mxu0 0.0
    %245 = vmatpush.msra.mxu0 0.0
    %246 = vmatpush.msra.mxu0 0.0
    %247 = vmatpush.msra.mxu0 0.0
    %248 = vmatpush.msra.mxu0 0.0
    %249 = vmatpush.msra.mxu0 %v224
    %250 = vmatpush.msra.mxu0 %v223
    %251 = vmatpush.msra.mxu0 %v222
    %252 = vmatpush.msra.mxu0 %v221
    %253 = vmatmul.f32.gmra.mxu0 %v226
    %v254 = vpop.f32.mrf.mxu0
    %v255 = vadd.f32 %v139, %v254
    %256 = vmatmul.f32.gmra.mxu0 %v229
    %v257 = vpop.f32.mrf.mxu0
    %v258 = vadd.f32 %v142, %v257
    %259 = vmatmul.f32.gmra.mxu0 %v232
    %v260 = vpop.f32.mrf.mxu0
    %v261 = vadd.f32 %v145, %v260
    %262 = vmatmul.f32.gmra.mxu0 %v235
    %v263 = vpop.f32.mrf.mxu0
    %v264 = vadd.f32 %v148, %v263
    %265 = vdwg.mxu0
    %v266 = vmax.f32 %v255, 0.0
    %v267 = vmax.f32 %v258, 0.0
    %v268 = vmax.f32 %v261, 0.0
    %v269 = vmax.f32 %v264, 0.0
    %v270 = vld [vmem:[%s7] sm:$0xff]
    %v271 = vld [vmem:[%s7 + $0x8] sm:$0xff]
    %v272 = vld [vmem:[%s7 + $0x10] sm:$0xff]
    %v273 = vld [vmem:[%s7 + $0x18] sm:$0xff]
    %v274 = vld [vmem:[%s7 + $0x20] sm:$0xff]
    %v275 = vld [vmem:[%s7 + $0x28] sm:$0xff]
    %v276 = vld [vmem:[%s7 + $0x30] sm:$0xff]
    %v277 = vld [vmem:[%s7 + $0x38] sm:$0xff]
    %v278 = vld [vmem:[%s8] sm:$0x1]
    %v280 = vperm.slane %v278, 0
    %vm282 = vcmask 523264
    %v284 = vsel %vm282, %v266, 0
    %v287 = vsel %vm282, %v267, 0
    %v290 = vsel %vm282, %v268, 0
    %v293 = vsel %vm282, %v269, 0
    %295 = vmatpush.msra.mxu0 0.0
    %296 = vmatpush.msra.mxu0 0.0
    %297 = vmatpush.msra.mxu0 0.0
    %298 = vmatpush.msra.mxu0 0.0
    %299 = vmatpush.msra.mxu0 0.0
    %300 = vmatpush.msra.mxu0 0.0
    %301 = vmatpush.msra.mxu0 0.0
    %302 = vmatpush.msra.mxu0 0.0
    %303 = vmatpush.msra.mxu0 %v277
    %304 = vmatpush.msra.mxu0 %v276
    %305 = vmatpush.msra.mxu0 %v275
    %306 = vmatpush.msra.mxu0 %v274
    %307 = vmatpush.msra.mxu0 %v273
    %308 = vmatpush.msra.mxu0 %v272
    %309 = vmatpush.msra.mxu0 %v271
    %310 = vmatpush.msra.mxu0 %v270
    %311 = vmatmul.f32.gmra.mxu0 %v284
    %v312 = vpop.f32.mrf.mxu0
    %v313 = vadd.f32 %v280, %v312
    %314 = vmatmul.f32.gmra.mxu0 %v287
    %v315 = vpop.f32.mrf.mxu0
    %v316 = vadd.f32 %v280, %v315
    %317 = vmatmul.f32.gmra.mxu0 %v290
    %v318 = vpop.f32.mrf.mxu0
    %v319 = vadd.f32 %v280, %v318
    %320 = vmatmul.f32.gmra.mxu0 %v293
    %v321 = vpop.f32.mrf.mxu0
    %v322 = vadd.f32 %v280, %v321
    %323 = vdwg.mxu0
    %v324 = vmax.f32 %v313, 0.0
    %v325 = vmax.f32 %v316, 0.0
    %v326 = vmax.f32 %v319, 0.0
    %v327 = vmax.f32 %v322, 0.0
    %328 = vmatpush.msra.mxu0 0.0
    %329 = vmatpush.msra.mxu0 0.0
    %330 = vmatpush.msra.mxu0 0.0
    %331 = vmatpush.msra.mxu0 0.0
    %332 = vmatpush.msra.mxu0 0.0
    %333 = vmatpush.msra.mxu0 0.0
    %334 = vmatpush.msra.mxu0 0.0
    %335 = vmatpush.msra.mxu0 0.0
    %336 = vmatpush.msra.mxu0 0.0
    %337 = vmatpush.msra.mxu0 0.0
    %338 = vmatpush.msra.mxu0 0.0
    %339 = vmatpush.msra.mxu0 0.0
    %340 = vmatpush.msra.mxu0 %v327
    %341 = vmatpush.msra.mxu0 %v326
    %342 = vmatpush.msra.mxu0 %v325
    %343 = vmatpush.msra.mxu0 %v324
    %344 = vmatmul.f32.gmra.mxu0 %v181
    %v345 = vpop.f32.mrf.mxu0
    %v346 = vadd.f32 0.0, %v345
    %347 = vmatmul.f32.gmra.mxu0 %v184
    %v348 = vpop.f32.mrf.mxu0
    %v349 = vadd.f32 0.0, %v348
    %350 = vmatmul.f32.gmra.mxu0 %v187
    %v351 = vpop.f32.mrf.mxu0
    %v352 = vadd.f32 0.0, %v351
    %353 = vmatmul.f32.gmra.mxu0 %v190
    %v354 = vpop.f32.mrf.mxu0
    %v355 = vadd.f32 0.0, %v354
    %356 = vdwg.mxu0
    %s357 = scalar_lea.vmem %s6, 32
    %v358 = vld [vmem:[%s357] sm:$0xff]
    %v359 = vld [vmem:[%s357 + $0x8] sm:$0xff]
    %v360 = vld [vmem:[%s357 + $0x10] sm:$0xff]
    %v361 = vld [vmem:[%s357 + $0x18] sm:$0xff]
    %366 = vrot.lane.b32.xlu0 %v139, 64
    %v367 = vpop.permute.xlu0 %366
    %368 = vrot.lane.b32.xlu0 %v142, 64
    %v369 = vpop.permute.xlu0 %368
    %370 = vrot.lane.b32.xlu0 %v145, 64
    %v371 = vpop.permute.xlu0 %370
    %372 = vrot.lane.b32.xlu0 %v148, 64
    %v373 = vpop.permute.xlu0 %372
    %v379 = vsel %vm179, %v346, 0
    %v382 = vsel %vm179, %v349, 0
    %v385 = vsel %vm179, %v352, 0
    %v388 = vsel %vm179, %v355, 0
    %390 = vmatpush.msra.mxu0 0.0
    %391 = vmatpush.msra.mxu0 0.0
    %392 = vmatpush.msra.mxu0 0.0
    %393 = vmatpush.msra.mxu0 0.0
    %394 = vmatpush.msra.mxu0 0.0
    %395 = vmatpush.msra.mxu0 0.0
    %396 = vmatpush.msra.mxu0 0.0
    %397 = vmatpush.msra.mxu0 0.0
    %398 = vmatpush.msra.mxu0 0.0
    %399 = vmatpush.msra.mxu0 0.0
    %400 = vmatpush.msra.mxu0 0.0
    %401 = vmatpush.msra.mxu0 0.0
    %402 = vmatpush.msra.mxu0 %v361
    %403 = vmatpush.msra.mxu0 %v360
    %404 = vmatpush.msra.mxu0 %v359
    %405 = vmatpush.msra.mxu0 %v358
    %406 = vmatmul.f32.gmra.mxu0 %v379
    %v407 = vpop.f32.mrf.mxu0
    %v408 = vadd.f32 %v367, %v407
    %409 = vmatmul.f32.gmra.mxu0 %v382
    %v410 = vpop.f32.mrf.mxu0
    %v411 = vadd.f32 %v369, %v410
    %412 = vmatmul.f32.gmra.mxu0 %v385
    %v413 = vpop.f32.mrf.mxu0
    %v414 = vadd.f32 %v371, %v413
    %415 = vmatmul.f32.gmra.mxu0 %v388
    %v416 = vpop.f32.mrf.mxu0
    %v417 = vadd.f32 %v373, %v416
    %418 = vdwg.mxu0
    %v419 = vmax.f32 %v408, 0.0
    %v420 = vmax.f32 %v411, 0.0
    %v421 = vmax.f32 %v414, 0.0
    %v422 = vmax.f32 %v417, 0.0
    %s423 = scalar_lea.vmem %s7, 64
    %v424 = vld [vmem:[%s423] sm:$0xff]
    %v425 = vld [vmem:[%s423 + $0x8] sm:$0xff]
    %v426 = vld [vmem:[%s423 + $0x10] sm:$0xff]
    %v427 = vld [vmem:[%s423 + $0x18] sm:$0xff]
    %v428 = vld [vmem:[%s423 + $0x20] sm:$0xff]
    %v429 = vld [vmem:[%s423 + $0x28] sm:$0xff]
    %v430 = vld [vmem:[%s423 + $0x30] sm:$0xff]
    %v431 = vld [vmem:[%s423 + $0x38] sm:$0xff]
    %s432 = scalar_lea.vmem %s8, 1
    %v433 = vld [vmem:[%s432] sm:$0x1]
    %v435 = vperm.slane %v433, 0
    %v438 = vsel %vm282, %v419, 0
    %v441 = vsel %vm282, %v420, 0
    %v444 = vsel %vm282, %v421, 0
    %v447 = vsel %vm282, %v422, 0
    %449 = vmatpush.msra.mxu0 0.0
    %450 = vmatpush.msra.mxu0 0.0
    %451 = vmatpush.msra.mxu0 0.0
    %452 = vmatpush.msra.mxu0 0.0
    %453 = vmatpush.msra.mxu0 0.0
    %454 = vmatpush.msra.mxu0 0.0
    %455 = vmatpush.msra.mxu0 0.0
    %456 = vmatpush.msra.mxu0 0.0
    %457 = vmatpush.msra.mxu0 %v431
    %458 = vmatpush.msra.mxu0 %v430
    %459 = vmatpush.msra.mxu0 %v429
    %460 = vmatpush.msra.mxu0 %v428
    %461 = vmatpush.msra.mxu0 %v427
    %462 = vmatpush.msra.mxu0 %v426
    %463 = vmatpush.msra.mxu0 %v425
    %464 = vmatpush.msra.mxu0 %v424
    %465 = vmatmul.f32.gmra.mxu0 %v438
    %v466 = vpop.f32.mrf.mxu0
    %v467 = vadd.f32 %v435, %v466
    %468 = vmatmul.f32.gmra.mxu0 %v441
    %v469 = vpop.f32.mrf.mxu0
    %v470 = vadd.f32 %v435, %v469
    %471 = vmatmul.f32.gmra.mxu0 %v444
    %v472 = vpop.f32.mrf.mxu0
    %v473 = vadd.f32 %v435, %v472
    %474 = vmatmul.f32.gmra.mxu0 %v447
    %v475 = vpop.f32.mrf.mxu0
    %v476 = vadd.f32 %v435, %v475
    %477 = vdwg.mxu0
    %v478 = vmax.f32 %v467, 0.0
    %v479 = vmax.f32 %v470, 0.0
    %v480 = vmax.f32 %v473, 0.0
    %v481 = vmax.f32 %v476, 0.0
    %482 = vmatpush.msra.mxu0 0.0
    %483 = vmatpush.msra.mxu0 0.0
    %484 = vmatpush.msra.mxu0 0.0
    %485 = vmatpush.msra.mxu0 0.0
    %486 = vmatpush.msra.mxu0 0.0
    %487 = vmatpush.msra.mxu0 0.0
    %488 = vmatpush.msra.mxu0 0.0
    %489 = vmatpush.msra.mxu0 0.0
    %490 = vmatpush.msra.mxu0 0.0
    %491 = vmatpush.msra.mxu0 0.0
    %492 = vmatpush.msra.mxu0 0.0
    %493 = vmatpush.msra.mxu0 0.0
    %494 = vmatpush.msra.mxu0 %v481
    %495 = vmatpush.msra.mxu0 %v480
    %496 = vmatpush.msra.mxu0 %v479
    %497 = vmatpush.msra.mxu0 %v478
    %498 = vmatmul.f32.gmra.mxu0 %v181
    %v499 = vpop.f32.mrf.mxu0
    %v500 = vadd.f32 0.0, %v499
    %501 = vmatmul.f32.gmra.mxu0 %v184
    %v502 = vpop.f32.mrf.mxu0
    %v503 = vadd.f32 0.0, %v502
    %504 = vmatmul.f32.gmra.mxu0 %v187
    %v505 = vpop.f32.mrf.mxu0
    %v506 = vadd.f32 0.0, %v505
    %507 = vmatmul.f32.gmra.mxu0 %v190
    %v508 = vpop.f32.mrf.mxu0
    %v509 = vadd.f32 0.0, %v508
    %510 = vdwg.mxu0
    %s511 = scalar_lea.vmem %s6, 64
    %v512 = vld [vmem:[%s511] sm:$0xff]
    %v513 = vld [vmem:[%s511 + $0x8] sm:$0xff]
    %v514 = vld [vmem:[%s511 + $0x10] sm:$0xff]
    %v515 = vld [vmem:[%s511 + $0x18] sm:$0xff]
    %v517 = vsel %vm179, %v500, 0
    %v520 = vsel %vm179, %v503, 0
    %v523 = vsel %vm179, %v506, 0
    %v526 = vsel %vm179, %v509, 0
    %528 = vmatpush.msra.mxu0 0.0
    %529 = vmatpush.msra.mxu0 0.0
    %530 = vmatpush.msra.mxu0 0.0
    %531 = vmatpush.msra.mxu0 0.0
    %532 = vmatpush.msra.mxu0 0.0
    %533 = vmatpush.msra.mxu0 0.0
    %534 = vmatpush.msra.mxu0 0.0
    %535 = vmatpush.msra.mxu0 0.0
    %536 = vmatpush.msra.mxu0 0.0
    %537 = vmatpush.msra.mxu0 0.0
    %538 = vmatpush.msra.mxu0 0.0
    %539 = vmatpush.msra.mxu0 0.0
    %540 = vmatpush.msra.mxu0 %v515
    %541 = vmatpush.msra.mxu0 %v514
    %542 = vmatpush.msra.mxu0 %v513
    %543 = vmatpush.msra.mxu0 %v512
    %544 = vmatmul.f32.gmra.mxu0 %v517
    %v545 = vpop.f32.mrf.mxu0
    %v546 = vadd.f32 %v168, %v545
    %547 = vmatmul.f32.gmra.mxu0 %v520
    %v548 = vpop.f32.mrf.mxu0
    %v549 = vadd.f32 %v171, %v548
    %550 = vmatmul.f32.gmra.mxu0 %v523
    %v551 = vpop.f32.mrf.mxu0
    %v552 = vadd.f32 %v174, %v551
    %553 = vmatmul.f32.gmra.mxu0 %v526
    %v554 = vpop.f32.mrf.mxu0
    %v555 = vadd.f32 %v177, %v554
    %556 = vdwg.mxu0
    %v557 = vmax.f32 %v546, 0.0
    %v558 = vmax.f32 %v549, 0.0
    %v559 = vmax.f32 %v552, 0.0
    %v560 = vmax.f32 %v555, 0.0
    %s561 = scalar_lea.vmem %s7, 128
    %v562 = vld [vmem:[%s561] sm:$0xff]
    %v563 = vld [vmem:[%s561 + $0x8] sm:$0xff]
    %v564 = vld [vmem:[%s561 + $0x10] sm:$0xff]
    %v565 = vld [vmem:[%s561 + $0x18] sm:$0xff]
    %v566 = vld [vmem:[%s561 + $0x20] sm:$0xff]
    %v567 = vld [vmem:[%s561 + $0x28] sm:$0xff]
    %v568 = vld [vmem:[%s561 + $0x30] sm:$0xff]
    %v569 = vld [vmem:[%s561 + $0x38] sm:$0xff]
    %s570 = scalar_lea.vmem %s8, 2
    %v571 = vld [vmem:[%s570] sm:$0x1]
    %v573 = vperm.slane %v571, 0
    %v576 = vsel %vm282, %v557, 0
    %v579 = vsel %vm282, %v558, 0
    %v582 = vsel %vm282, %v559, 0
    %v585 = vsel %vm282, %v560, 0
    %587 = vmatpush.msra.mxu0 0.0
    %588 = vmatpush.msra.mxu0 0.0
    %589 = vmatpush.msra.mxu0 0.0
    %590 = vmatpush.msra.mxu0 0.0
    %591 = vmatpush.msra.mxu0 0.0
    %592 = vmatpush.msra.mxu0 0.0
    %593 = vmatpush.msra.mxu0 0.0
    %594 = vmatpush.msra.mxu0 0.0
    %595 = vmatpush.msra.mxu0 %v569
    %596 = vmatpush.msra.mxu0 %v568
    %597 = vmatpush.msra.mxu0 %v567
    %598 = vmatpush.msra.mxu0 %v566
    %599 = vmatpush.msra.mxu0 %v565
    %600 = vmatpush.msra.mxu0 %v564
    %601 = vmatpush.msra.mxu0 %v563
    %602 = vmatpush.msra.mxu0 %v562
    %603 = vmatmul.f32.gmra.mxu0 %v576
    %v604 = vpop.f32.mrf.mxu0
    %v605 = vadd.f32 %v573, %v604
    %606 = vmatmul.f32.gmra.mxu0 %v579
    %v607 = vpop.f32.mrf.mxu0
    %v608 = vadd.f32 %v573, %v607
    %609 = vmatmul.f32.gmra.mxu0 %v582
    %v610 = vpop.f32.mrf.mxu0
    %v611 = vadd.f32 %v573, %v610
    %612 = vmatmul.f32.gmra.mxu0 %v585
    %v613 = vpop.f32.mrf.mxu0
    %v614 = vadd.f32 %v573, %v613
    %615 = vdwg.mxu0
    %v616 = vld [vmem:[%s3] sm:$0xff]
    %v618 = vsel %vm179, %v616, 0
    %620 = vmatpush.msra.mxu0 0.0
    %621 = vmatpush.msra.mxu0 0.0
    %622 = vmatpush.msra.mxu0 0.0
    %623 = vmatpush.msra.mxu0 0.0
    %624 = vmatpush.msra.mxu0 0.0
    %625 = vmatpush.msra.mxu0 0.0
    %626 = vmatpush.msra.mxu0 0.0
    %627 = vmatpush.msra.mxu0 0.0
    %628 = vmatpush.msra.mxu0 0.0
    %629 = vmatpush.msra.mxu0 0.0
    %630 = vmatpush.msra.mxu0 0.0
    %631 = vmatpush.msra.mxu0 0.0
    %632 = vmatpush.msra.mxu0 %v614
    %633 = vmatpush.msra.mxu0 %v611
    %634 = vmatpush.msra.mxu0 %v608
    %635 = vmatpush.msra.mxu0 %v605
    %636 = vmatmul.f32.gmra.mxu0 %v618
    %v637 = vpop.f32.mrf.mxu0
    %v638 = vadd.f32 0.0, %v637
    %639 = vdwg.mxu0
    %v640 = vld [vmem:[%s9] sm:$0xff]
    %v641 = vld [vmem:[%s9 + $0x8] sm:$0xff]
    %v642 = vld [vmem:[%s9 + $0x10] sm:$0xff]
    %v643 = vld [vmem:[%s9 + $0x18] sm:$0xff]
    %v644 = vld [vmem:[%s10] sm:$0x1]
    %v646 = vperm.slane %v644, 0
    %v649 = vsel %vm179, %v638, 0
    %651 = vmatpush.msra.mxu0 0.0
    %652 = vmatpush.msra.mxu0 0.0
    %653 = vmatpush.msra.mxu0 0.0
    %654 = vmatpush.msra.mxu0 0.0
    %655 = vmatpush.msra.mxu0 0.0
    %656 = vmatpush.msra.mxu0 0.0
    %657 = vmatpush.msra.mxu0 0.0
    %658 = vmatpush.msra.mxu0 0.0
    %659 = vmatpush.msra.mxu0 0.0
    %660 = vmatpush.msra.mxu0 0.0
    %661 = vmatpush.msra.mxu0 0.0
    %662 = vmatpush.msra.mxu0 0.0
    %663 = vmatpush.msra.mxu0 %v643
    %664 = vmatpush.msra.mxu0 %v642
    %665 = vmatpush.msra.mxu0 %v641
    %666 = vmatpush.msra.mxu0 %v640
    %667 = vmatmul.f32.gmra.mxu0 %v649
    %v668 = vpop.f32.mrf.mxu0
    %v669 = vadd.f32 %v646, %v668
    %670 = vdwg.mxu0
    %671 = vst [vmem:[#allocation2] sm:$0xff] %v669
    // Predicated region
    $region46: #{tpu_custom_call.1} parent=1 // pred_check
      _
    $region47: #{tpu_custom_call.1} parent=1 // pred_check_branch
      %673 = sbr.rel (0) target = $region49
    $region48: #{tpu_custom_call.1} parent=1 // pred_region
      %675 = vsyncadd [#allocation3], 0
      %s677 = sshll.u32 [#allocation2], 4
      %s678 = int_to_ptr.vmem [resolvable:$true] %s677
      %s679 = sshll.u32 %s11, 4
      %s680 = int_to_ptr.hbm [resolvable:$true] %s679
      %682 = dma.vmem_to_hbm [thread:$0]  %s678, 128, %s680, [#allocation3]
    $region49: #{tpu_custom_call.1} parent=1 // pred_fallthru
      _
    // Predicated region
    $region50: #{tpu_custom_call.1} parent=1 // pred_check
      _
    $region51: #{tpu_custom_call.1} parent=1 // pred_check_branch
      %684 = sbr.rel (0) target = $region53
    $region52: #{tpu_custom_call.1} parent=1 // pred_region
      %686 = dma.done [#allocation3], 128
    $region53: #{tpu_custom_call.1} parent=1 // pred_fallthru
      _
    %687 = vsyncpa [#allocation3], 1

</llo_original>
